<compile_context>
chip_gen: v7x
topology: tpu7x:2x2x1
jax: 0.10.0
libtpu: 0.0.40
codegen_flags: <defaults>
</compile_context>

<pallas_src>
import functools

import jax
import jax.numpy as jnp
from jax.experimental import pallas as pl
from jax.experimental.pallas import tpu as pltpu


def _split_dma_kernel(x_hbm, s0_hbm, s1_hbm, s2_hbm, sems, *, tb):
    """Pure HBM->HBM DMA split. x_hbm: (B, 3, HW); s*_hbm: (B, 1, HW)."""
    i = pl.program_id(0)
    start = pl.multiple_of(i * tb, tb)

    copies = []
    for c, dst in enumerate((s0_hbm, s1_hbm, s2_hbm)):
        cp = pltpu.make_async_copy(
            x_hbm.at[pl.ds(start, tb), pl.ds(c, 1), :],   # (tb, 1, HW) strided src
            dst.at[pl.ds(start, tb), :, :],               # (tb, 1, HW) dense dst
            sems.at[c],
        )
        cp.start()
        copies.append(cp)
    for cp in copies:
        cp.wait()


def _pick_batch_tile(B, HW, itemsize, *, min_steps=2, target_step_bytes=32 << 20):
    # Pure-DMA kernel: no VMEM staging, so the tile only sets DMA granularity
    # and grid length. Per batch row the kernel moves 3*HW in + 3*HW out.
    row_bytes = 2 * 3 * HW * itemsize
    tb = max(1, target_step_bytes // max(1, row_bytes))
    if B >= min_steps:
        # Keep >= 2 grid steps so both v7x TensorCores get work under "parallel".
        tb = min(tb, B // min_steps)
    tb = max(1, min(tb, B))
    # Round down to an exact divisor of B: disjoint, full tiles, no remainder.
    while B % tb != 0:
        tb -= 1
    return tb


def _split_pallas(v1):
    B, C, H, W = v1.shape
    assert C == 3, "torch.split(v1, [1,1,1], dim=1) requires dim 1 of size 3"
    HW = H * W
    x = v1.reshape(B, 3, HW)                      # lane axis = H*W (lane-dense)

    tb = _pick_batch_tile(B, HW, x.dtype.itemsize)
    grid = (B // tb,)

    any_spec = pl.BlockSpec(memory_space=pl.ANY)  # raw HBM refs, manual DMA
    out_shapes = tuple(
        jax.ShapeDtypeStruct((B, 1, HW), v1.dtype) for _ in range(3)
    )
    bytes_accessed = 2 * B * 3 * HW * x.dtype.itemsize

    s0, s1, s2 = pl.pallas_call(
        functools.partial(_split_dma_kernel, tb=tb),
        out_shape=out_shapes,
        grid=grid,
        in_specs=[any_spec],
        out_specs=(any_spec, any_spec, any_spec),
        scratch_shapes=[pltpu.SemaphoreType.DMA((3,))],
        compiler_params=pltpu.CompilerParams(
            dimension_semantics=("parallel",)
        ),
        cost_estimate=pl.CostEstimate(
            flops=0, transcendentals=0, bytes_accessed=bytes_accessed
        ),
    )(x)

    return (
        s0.reshape(B, 1, H, W),
        s1.reshape(B, 1, H, W),
        s2.reshape(B, 1, H, W),
    )


def model_forward(v1, *, force_pallas=False):
    """Returns (concatenated_tensor, (split0, split1, split2)) like the torch Model."""
    B, C, H, W = v1.shape
    assert C == 3

    # cat(split(v1, [1,1,1], dim=1), dim=1) is bit-identical to v1: return it
    # directly (aliased; JAX arrays are immutable so this is safe).
    concatenated = v1

    # For standalone use, XLA's strided slice copies are already HBM-roofline
    # with no grid-step overhead; only take the Pallas path when forced (or if
    # this ever gets fused with real compute).
    if not force_pallas:
        splits = (v1[:, 0:1], v1[:, 1:2], v1[:, 2:3])
        return concatenated, splits

    splits = _split_pallas(v1)
    return concatenated, splits


def init_unused_features_params(key):
    # MyModule.block contains nn.Linear(64, 1); never used in Model.forward.
    kw, kb = jax.random.split(key)
    w = jax.random.normal(kw, (1, 64), dtype=jnp.float32) * 0.05
    b = jax.random.normal(kb, (1,), dtype=jnp.float32) * 0.05
    return {"linear_w": w, "linear_b": b}


if __name__ == "__main__":
    key = jax.random.PRNGKey(0)
    k_in, k_params = jax.random.split(key)

    # Small shape consistent with torch.split(v1, [1,1,1], dim=1): C must be 3.
    v1 = jax.random.normal(k_in, (2, 3, 16, 16), dtype=jnp.float32)

    _unused_params = init_unused_features_params(k_params)  # parity with __init__

    # Force the Pallas path so the DMA kernel is actually exercised.
    cat, splits = model_forward(v1, force_pallas=True)
    jax.block_until_ready(cat)
    jax.block_until_ready(splits)

    # Reference check in plain JAX.
    ref_splits = (v1[:, 0:1], v1[:, 1:2], v1[:, 2:3])
    ref_cat = jnp.concatenate(ref_splits, axis=1)
    assert jnp.array_equal(cat, ref_cat)
    for a, b in zip(splits, ref_splits):
        assert a.shape == b.shape
        assert jnp.array_equal(a, b)

    print("KERNEL_OK")
</pallas_src>

<mosaic_0001>
module attributes {stable_mosaic.version = 11 : i64} {
  func.func @_split_dma_kernel(%arg0: i32, %arg1: memref<2x3x256xf32, #tpu.memory_space<any>>, %arg2: memref<2x1x256xf32, #tpu.memory_space<any>>, %arg3: memref<2x1x256xf32, #tpu.memory_space<any>>, %arg4: memref<2x1x256xf32, #tpu.memory_space<any>>, %arg5: memref<3x!tpu.dma_semaphore, #tpu.memory_space<semaphore_mem>>) attributes {dimension_semantics = [#tpu.dimension_semantics<parallel>], iteration_bounds = array<i64: 2>, scalar_prefetch = 0 : i64, scratch_operands = 1 : i64, tpu.core_type = #tpu.core_type<tc>, window_params = [{}, {}, {}, {}]} {
    %c1_i32 = arith.constant 1 : i32
    %0 = arith.muli %arg0, %c1_i32 : i32
    %1 = tpu.assume_multiple %0, 1 : i32
    %c0_i32 = arith.constant 0 : i32
    %c0_i32_0 = arith.constant 0 : i32
    %c0_i32_1 = arith.constant 0 : i32
    %2 = tpu.memref_slice %arg1[%1, %c0_i32_0, %c0_i32_1] : memref<2x3x256xf32, #tpu.memory_space<any>> -> memref<1x1x256xf32, #tpu.memory_space<any>>
    %c0_i32_2 = arith.constant 0 : i32
    %c0_i32_3 = arith.constant 0 : i32
    %3 = tpu.memref_slice %arg2[%1, %c0_i32_2, %c0_i32_3] : memref<2x1x256xf32, #tpu.memory_space<any>> -> memref<1x1x256xf32, #tpu.memory_space<any>>
    %4 = tpu.memref_slice %arg5[%c0_i32] : memref<3x!tpu.dma_semaphore, #tpu.memory_space<semaphore_mem>> -> memref<1x!tpu.dma_semaphore, #tpu.memory_space<semaphore_mem>>
    %5 = tpu.memref_squeeze %4 : memref<1x!tpu.dma_semaphore, #tpu.memory_space<semaphore_mem>> -> memref<!tpu.dma_semaphore, #tpu.memory_space<semaphore_mem>>
    tpu.enqueue_dma source(%2 : memref<1x1x256xf32, #tpu.memory_space<any>>) target(%3 : memref<1x1x256xf32, #tpu.memory_space<any>>) target_semaphore(%5 : memref<!tpu.dma_semaphore, #tpu.memory_space<semaphore_mem>>)
    %c1_i32_4 = arith.constant 1 : i32
    %c1_i32_5 = arith.constant 1 : i32
    %c0_i32_6 = arith.constant 0 : i32
    %6 = tpu.memref_slice %arg1[%1, %c1_i32_5, %c0_i32_6] : memref<2x3x256xf32, #tpu.memory_space<any>> -> memref<1x1x256xf32, #tpu.memory_space<any>>
    %c0_i32_7 = arith.constant 0 : i32
    %c0_i32_8 = arith.constant 0 : i32
    %7 = tpu.memref_slice %arg3[%1, %c0_i32_7, %c0_i32_8] : memref<2x1x256xf32, #tpu.memory_space<any>> -> memref<1x1x256xf32, #tpu.memory_space<any>>
    %8 = tpu.memref_slice %arg5[%c1_i32_4] : memref<3x!tpu.dma_semaphore, #tpu.memory_space<semaphore_mem>> -> memref<1x!tpu.dma_semaphore, #tpu.memory_space<semaphore_mem>>
    %9 = tpu.memref_squeeze %8 : memref<1x!tpu.dma_semaphore, #tpu.memory_space<semaphore_mem>> -> memref<!tpu.dma_semaphore, #tpu.memory_space<semaphore_mem>>
    tpu.enqueue_dma source(%6 : memref<1x1x256xf32, #tpu.memory_space<any>>) target(%7 : memref<1x1x256xf32, #tpu.memory_space<any>>) target_semaphore(%9 : memref<!tpu.dma_semaphore, #tpu.memory_space<semaphore_mem>>)
    %c2_i32 = arith.constant 2 : i32
    %c2_i32_9 = arith.constant 2 : i32
    %c0_i32_10 = arith.constant 0 : i32
    %10 = tpu.memref_slice %arg1[%1, %c2_i32_9, %c0_i32_10] : memref<2x3x256xf32, #tpu.memory_space<any>> -> memref<1x1x256xf32, #tpu.memory_space<any>>
    %c0_i32_11 = arith.constant 0 : i32
    %c0_i32_12 = arith.constant 0 : i32
    %11 = tpu.memref_slice %arg4[%1, %c0_i32_11, %c0_i32_12] : memref<2x1x256xf32, #tpu.memory_space<any>> -> memref<1x1x256xf32, #tpu.memory_space<any>>
    %12 = tpu.memref_slice %arg5[%c2_i32] : memref<3x!tpu.dma_semaphore, #tpu.memory_space<semaphore_mem>> -> memref<1x!tpu.dma_semaphore, #tpu.memory_space<semaphore_mem>>
    %13 = tpu.memref_squeeze %12 : memref<1x!tpu.dma_semaphore, #tpu.memory_space<semaphore_mem>> -> memref<!tpu.dma_semaphore, #tpu.memory_space<semaphore_mem>>
    tpu.enqueue_dma source(%10 : memref<1x1x256xf32, #tpu.memory_space<any>>) target(%11 : memref<1x1x256xf32, #tpu.memory_space<any>>) target_semaphore(%13 : memref<!tpu.dma_semaphore, #tpu.memory_space<semaphore_mem>>)
    %c0_i32_13 = arith.constant 0 : i32
    %c0_i32_14 = arith.constant 0 : i32
    %c0_i32_15 = arith.constant 0 : i32
    %14 = tpu.memref_slice %arg1[%1, %c0_i32_14, %c0_i32_15] : memref<2x3x256xf32, #tpu.memory_space<any>> -> memref<1x1x256xf32, #tpu.memory_space<any>>
    %c0_i32_16 = arith.constant 0 : i32
    %c0_i32_17 = arith.constant 0 : i32
    %15 = tpu.memref_slice %arg2[%1, %c0_i32_16, %c0_i32_17] : memref<2x1x256xf32, #tpu.memory_space<any>> -> memref<1x1x256xf32, #tpu.memory_space<any>>
    %16 = tpu.memref_slice %arg5[%c0_i32_13] : memref<3x!tpu.dma_semaphore, #tpu.memory_space<semaphore_mem>> -> memref<1x!tpu.dma_semaphore, #tpu.memory_space<semaphore_mem>>
    %17 = tpu.memref_squeeze %16 : memref<1x!tpu.dma_semaphore, #tpu.memory_space<semaphore_mem>> -> memref<!tpu.dma_semaphore, #tpu.memory_space<semaphore_mem>>
    tpu.wait_dma2 semaphore(%17 : memref<!tpu.dma_semaphore, #tpu.memory_space<semaphore_mem>>) src(%14 : memref<1x1x256xf32, #tpu.memory_space<any>>) dst(%15 : memref<1x1x256xf32, #tpu.memory_space<any>>)
    %c1_i32_18 = arith.constant 1 : i32
    %c1_i32_19 = arith.constant 1 : i32
    %c0_i32_20 = arith.constant 0 : i32
    %18 = tpu.memref_slice %arg1[%1, %c1_i32_19, %c0_i32_20] : memref<2x3x256xf32, #tpu.memory_space<any>> -> memref<1x1x256xf32, #tpu.memory_space<any>>
    %c0_i32_21 = arith.constant 0 : i32
    %c0_i32_22 = arith.constant 0 : i32
    %19 = tpu.memref_slice %arg3[%1, %c0_i32_21, %c0_i32_22] : memref<2x1x256xf32, #tpu.memory_space<any>> -> memref<1x1x256xf32, #tpu.memory_space<any>>
    %20 = tpu.memref_slice %arg5[%c1_i32_18] : memref<3x!tpu.dma_semaphore, #tpu.memory_space<semaphore_mem>> -> memref<1x!tpu.dma_semaphore, #tpu.memory_space<semaphore_mem>>
    %21 = tpu.memref_squeeze %20 : memref<1x!tpu.dma_semaphore, #tpu.memory_space<semaphore_mem>> -> memref<!tpu.dma_semaphore, #tpu.memory_space<semaphore_mem>>
    tpu.wait_dma2 semaphore(%21 : memref<!tpu.dma_semaphore, #tpu.memory_space<semaphore_mem>>) src(%18 : memref<1x1x256xf32, #tpu.memory_space<any>>) dst(%19 : memref<1x1x256xf32, #tpu.memory_space<any>>)
    %c2_i32_23 = arith.constant 2 : i32
    %c2_i32_24 = arith.constant 2 : i32
    %c0_i32_25 = arith.constant 0 : i32
    %22 = tpu.memref_slice %arg1[%1, %c2_i32_24, %c0_i32_25] : memref<2x3x256xf32, #tpu.memory_space<any>> -> memref<1x1x256xf32, #tpu.memory_space<any>>
    %c0_i32_26 = arith.constant 0 : i32
    %c0_i32_27 = arith.constant 0 : i32
    %23 = tpu.memref_slice %arg4[%1, %c0_i32_26, %c0_i32_27] : memref<2x1x256xf32, #tpu.memory_space<any>> -> memref<1x1x256xf32, #tpu.memory_space<any>>
    %24 = tpu.memref_slice %arg5[%c2_i32_23] : memref<3x!tpu.dma_semaphore, #tpu.memory_space<semaphore_mem>> -> memref<1x!tpu.dma_semaphore, #tpu.memory_space<semaphore_mem>>
    %25 = tpu.memref_squeeze %24 : memref<1x!tpu.dma_semaphore, #tpu.memory_space<semaphore_mem>> -> memref<!tpu.dma_semaphore, #tpu.memory_space<semaphore_mem>>
    tpu.wait_dma2 semaphore(%25 : memref<!tpu.dma_semaphore, #tpu.memory_space<semaphore_mem>>) src(%22 : memref<1x1x256xf32, #tpu.memory_space<any>>) dst(%23 : memref<1x1x256xf32, #tpu.memory_space<any>>)
    return
  }
}

</mosaic_0001>

<llo_original>
// kernel: tpu_custom_call.1
$region0: #{tpu_custom_call.1}
  #allocation0 [shape = 'u32[]', space=smem, size = 0x4, offset = 0x4, fixed_abs, tag = 'smem constant byte address 0x4 - core index']
  #allocation1 [shape = 'u32[144,128]{1,0:T(1,128)}', space=vmem, size = 0x12000, scoped, tag = 'internal scratch']
  #allocation2 [shape = 's32[3]{0}', space=sflag, size = 0xc, scoped, tag = 'scratch operand']
  #allocation3 [shape = 's32[]', space=sflag, size = 0x4, offset = 0, fixed_abs, tag = 'sflag constant byte address 0x0 - dummy sync flag']
  #allocation4 [shape = 's32[]', space=sflag, size = 0x4, offset = 0, fixed_abs, tag = 'sflag constant byte address 0x0 - dummy sync flag']
  #allocation5 [shape = 's32[]', space=sflag, size = 0x4, offset = 0, fixed_abs, tag = 'sflag constant byte address 0x0 - dummy sync flag']
  %s0 = inlined_call_operand.vmem [shape: f32[2,3,256], index: 0, kind: input, shape index: {}]
  %s1 = inlined_call_operand.hbm [shape: f32[2,1,256], index: 1, kind: output, shape index: {0}]
  %s2 = inlined_call_operand.hbm [shape: f32[2,1,256], index: 2, kind: output, shape index: {1}]
  %s3 = inlined_call_operand.hbm [shape: f32[2,1,256], index: 3, kind: output, shape index: {2}]
  %4 = xla_tuple %s1, %s2, %s3
  %s5 = sld [smem:[#allocation0]]
  $region9: #{tpu_custom_call.1} parent=0
    _
  %s7 = ssub.s32 1, %s5
  %s8 = scalar_select 0, %s7, %s5
  loop: start=0, step=1, limit=2
  $region2: #{tpu_custom_call.1} parent=0 // loop_pre_header
    _
  $region3: #{tpu_custom_call.1} parent=0 // loop_header
    %s10 = sphi 0, %s14
    %p11 = scmp.ge.s32.totalorder %s10, 2
  $region4: #{tpu_custom_call.1} parent=0 // loop_header_branch
    %13 = sbr.rel (%p11) target = $region8
  $region5: #{tpu_custom_call.1} parent=0 // loop_body
    %s15 = sadd.s32 %s10, 1
    %s16 = smul.u32 %s10, 8
    %s17 = scalar_lea.vmem %s0, %s16
    %s18 = smul.u32 %s10, 2
    %s19 = smul.addr %s18, 16
    %s20 = scalar_lea.hbm %s1, %s19
    %s22 = sshll.u32 %s17, 4
    %s23 = int_to_ptr.vmem [resolvable:$true] %s22
    %25 = dma.vmem_to_hbm [thread:$0]  %s23, 32, %s20, [#allocation2], 64, 16, 1
    %s26 = sadd.s32 1, %s16
    %s27 = scalar_lea.vmem %s0, %s26
    %s28 = smul.addr %s18, 16
    %s29 = scalar_lea.hbm %s2, %s28
    %s30 = scalar_lea.sflag [#allocation2], 1
    %s32 = sshll.u32 %s27, 4
    %s33 = int_to_ptr.vmem [resolvable:$true] %s32
    %35 = dma.vmem_to_hbm [thread:$0]  %s33, 32, %s29, %s30, 64, 16, 1
    %s36 = sadd.s32 2, %s16
    %s37 = scalar_lea.vmem %s0, %s36
    %s38 = smul.addr %s18, 16
    %s39 = scalar_lea.hbm %s3, %s38
    %s40 = scalar_lea.sflag [#allocation2], 2
    %s42 = sshll.u32 %s37, 4
    %s43 = int_to_ptr.vmem [resolvable:$true] %s42
    %45 = dma.vmem_to_hbm [thread:$0]  %s43, 32, %s39, %s40, 64, 16, 1
    %s46 = smul.u32 1, 1
    %s47 = smul.u32 %s46, 2
    %s48 = sshll.u32 %s47, 4
    %49 = dma.done [#allocation2], %s48
    %s50 = sshll.u32 %s47, 4
    %51 = dma.done %s30, %s50
    %s52 = sshll.u32 %s47, 4
    %53 = dma.done %s40, %s52
  $region6: #{tpu_custom_call.1} parent=0 // loop_footer
    %s14 = sadd.s32 1, %s10
  $region7: #{tpu_custom_call.1} parent=0 // loop_footer_branch
    %9 = sbr.rel target = $region3
  $region8: #{tpu_custom_call.1} parent=0 // loop_exit
    _
  %54 = vsyncmov [#allocation2]
  %s55 = vpop.sfrf %54
  %p56 = scmp.eq.s32.totalorder %s55, 0
  %p57 = pneg %p56
  %59 = shalt.err (%p57)
  %s60 = scalar_lea.sflag [#allocation2], 1
  %61 = vsyncmov %s60
  %s62 = vpop.sfrf %61
  %p63 = scmp.eq.s32.totalorder %s62, 0
  %p64 = pneg %p63
  %66 = shalt.err (%p64)
  %s67 = scalar_lea.sflag [#allocation2], 2
  %68 = vsyncmov %s67
  %s69 = vpop.sfrf %68
  %p70 = scmp.eq.s32.totalorder %s69, 0
  %p71 = pneg %p70
  %73 = shalt.err (%p71)

</llo_original>
